<compile_context>
chip_gen: v6e
topology: v6e:2x2x1
jax: 0.10.0
libtpu: 0.0.40
codegen_flags: <defaults>
</compile_context>

<pallas_src>
import numpy as np
import jax
import jax.numpy as jnp
from jax.experimental import pallas as pl
from jax.experimental.pallas import tpu as pltpu


# ---------------------------------------------------------------------------
# Pallas kernel: tiled  z = noise @ L^T + m   (L^T passed in, so plain matmul)
# ---------------------------------------------------------------------------
def _sv_kernel(noise_ref, lt_ref, m_ref, o_ref, acc_ref):
    k = pl.program_id(2)

    @pl.when(k == 0)
    def _():
        # Fuse the bias into the accumulator init: acc starts at broadcast(m).
        acc_ref[...] = jnp.zeros_like(acc_ref) + m_ref[...]

    acc_ref[...] += jnp.dot(
        noise_ref[...], lt_ref[...], preferred_element_type=jnp.float32
    )

    @pl.when(k == pl.num_programs(2) - 1)
    def _():
        # Bias already folded in at init; epilogue is a plain cast-store.
        o_ref[...] = acc_ref[...].astype(o_ref.dtype)


def _round_up(x, m):
    return (x + m - 1) // m * m


def _pick_tile(dim_pad, unit, cap):
    """Largest multiple of `unit` that divides dim_pad and is <= cap."""
    best = unit
    t = unit
    while t <= min(dim_pad, cap):
        if dim_pad % t == 0:
            best = t
        t += unit
    return best


def structured_variational_forward(noise, L_T, m):
    """noise: (n_sample, d_total), L_T: (d_total, d_total) == L transposed,
    m: (d_total,).  Returns z = m + noise @ L.T  of shape (n_sample, d_total)."""
    n_sample, d_total = noise.shape

    # Pad: sublane axis to multiple of 8, lane/contracting axes to multiple of 128.
    M_pad = _round_up(max(n_sample, 8), 8)
    D_pad = _round_up(max(d_total, 128), 128)

    # Tile sizes: VMEM-budget-aware (fits v7x 64 MiB and v5e's 16 MiB scoped
    # default with double buffering), MXU-aligned (multiples of 128).
    TM = _pick_tile(M_pad, 8, 256)
    TN = _pick_tile(D_pad, 128, 512)
    TK = _pick_tile(D_pad, 128, 512)

    noise_p = jnp.pad(
        noise.astype(jnp.float32), ((0, M_pad - n_sample), (0, D_pad - d_total))
    )
    lt_p = jnp.pad(
        L_T.astype(jnp.float32), ((0, D_pad - d_total), (0, D_pad - d_total))
    )
    m_p = jnp.pad(
        m.astype(jnp.float32).reshape(1, d_total), ((0, 0), (0, D_pad - d_total))
    )

    grid = (M_pad // TM, D_pad // TN, D_pad // TK)

    out = pl.pallas_call(
        _sv_kernel,
        out_shape=jax.ShapeDtypeStruct((M_pad, D_pad), jnp.float32),
        grid_spec=pltpu.PrefetchScalarGridSpec(
            num_scalar_prefetch=0,
            grid=grid,
            in_specs=[
                pl.BlockSpec((TM, TK), lambda i, j, k: (i, k)),   # noise tile
                pl.BlockSpec((TK, TN), lambda i, j, k: (k, j)),   # L^T tile
                pl.BlockSpec((1, TN), lambda i, j, k: (0, j)),    # m row tile
            ],
            out_specs=pl.BlockSpec((TM, TN), lambda i, j, k: (i, j)),
            scratch_shapes=[pltpu.VMEM((TM, TN), jnp.float32)],
        ),
        compiler_params=pltpu.CompilerParams(
            dimension_semantics=("parallel", "parallel", "arbitrary"),
        ),
        cost_estimate=pl.CostEstimate(
            flops=2 * M_pad * D_pad * D_pad,
            transcendentals=0,
            bytes_accessed=4 * (2 * M_pad * D_pad + D_pad * D_pad + D_pad),
        ),
    )(noise_p, lt_p, m_p)

    return out[:n_sample, :d_total]


# ---------------------------------------------------------------------------
# Parameter setup (mirrors StructuredVariational.__init__ / construct_matrix)
# ---------------------------------------------------------------------------
def init_params(d_z, d_y, N):
    d_total = d_z + N * d_y

    # m = zeros
    m = np.zeros((d_total,), dtype=np.float32)

    # Lz_flat: lower-triangular flatten of eye(d_z)
    Lz = np.eye(d_z, dtype=np.float32)
    Lz_flat = np.concatenate([Lz[i, : i + 1] for i in range(d_z)])

    # Ly_blocks_flat: per-block lower-tri flatten of eye(d_y), N blocks
    Ly = np.eye(d_y, dtype=np.float32)
    tril_mask = np.tril(np.ones((d_y, d_y), dtype=bool)).flatten()
    Ly_blocks_flat = np.concatenate([Ly.flatten()[tril_mask] for _ in range(N)])

    # Lyz_flat: zeros (N*d_y, d_z)
    Lyz_flat = np.zeros((N * d_y * d_z,), dtype=np.float32)

    # Indices (same ordering as the PyTorch module)
    indices = []
    for i in range(d_z):
        for j in range(i + 1):
            indices.append([i, j])
    for n in range(N):
        for i in range(d_y):
            for j in range(i + 1):
                indices.append([d_z + n * d_y + i, d_z + n * d_y + j])
    for n in range(N):
        for i in range(d_y):
            for j in range(d_z):
                indices.append([d_z + n * d_y + i, j])
    indices = np.asarray(indices, dtype=np.int32)  # (nnz, 2)

    values = np.concatenate([Lz_flat, Ly_blocks_flat, Lyz_flat]).astype(np.float32)
    return m, indices, values, d_total


def construct_matrix_transposed(indices, values, d_total):
    """Build L^T directly (sparse COO scatter with swapped coordinates) so the
    kernel never has to transpose.  No duplicate coords -> .add == .set."""
    LT = jnp.zeros((d_total, d_total), dtype=jnp.float32)
    LT = LT.at[indices[:, 1], indices[:, 0]].add(jnp.asarray(values))
    return LT


# ---------------------------------------------------------------------------
if __name__ == "__main__":
    def run_case(d_z, d_y, N, n_sample, seed):
        m_np, indices, values, d_total = init_params(d_z, d_y, N)
        LT = construct_matrix_transposed(indices, values, d_total)
        m = jnp.asarray(m_np)

        key = jax.random.PRNGKey(seed)
        noise = jax.random.normal(key, (n_sample, d_total), dtype=jnp.float32)

        z = structured_variational_forward(noise, LT, m)
        z = jax.block_until_ready(z)

        # Plain-JAX reference of the same math (L = LT^T).
        z_ref = m[None, :] + noise @ LT
        assert z.shape == (n_sample, d_total)
        np.testing.assert_allclose(np.asarray(z), np.asarray(z_ref), rtol=1e-5, atol=1e-5)

    # Small shapes consistent with the module's constructor (jitter unused in forward).
    run_case(d_z=4, d_y=3, N=4, n_sample=8, seed=0)

    # Slightly larger case to exercise multi-tile K accumulation + padding paths.
    run_case(d_z=4, d_y=8, N=77, n_sample=16, seed=1)

    print("KERNEL_OK")
</pallas_src>

<mosaic_0001>
module attributes {stable_mosaic.version = 11 : i64} {
  func.func @_sv_kernel(%arg0: i32, %arg1: i32, %arg2: i32, %arg3: memref<8x128xf32, #tpu.memory_space<vmem>>, %arg4: memref<128x128xf32, #tpu.memory_space<vmem>>, %arg5: memref<1x128xf32, #tpu.memory_space<vmem>>, %arg6: memref<8x128xf32, #tpu.memory_space<vmem>>, %arg7: memref<8x128xf32, #tpu.memory_space<vmem>>) attributes {dimension_semantics = [#tpu.dimension_semantics<parallel>, #tpu.dimension_semantics<parallel>, #tpu.dimension_semantics<arbitrary>], iteration_bounds = array<i64: 1, 1, 1>, scalar_prefetch = 0 : i64, scratch_operands = 1 : i64, tpu.core_type = #tpu.core_type<tc>, window_params = [{transform_indices = @transform_0, window_bounds = array<i64: 8, 128>}, {transform_indices = @transform_1, window_bounds = array<i64: 128, 128>}, {transform_indices = @transform_2, window_bounds = array<i64: 1, 128>}, {transform_indices = @transform_3, window_bounds = array<i64: 8, 128>}]} {
    %c0_i32 = arith.constant 0 : i32
    %0 = arith.cmpi eq, %arg2, %c0_i32 : i32
    %1 = arith.extui %0 : i1 to i32
    %c0_i32_0 = arith.constant 0 : i32
    %2 = arith.cmpi ne, %1, %c0_i32_0 : i32
    scf.if %2 {
      %cst_10 = arith.constant 0.000000e+00 : f32
      %12 = vector.broadcast %cst_10 : f32 to vector<8x128xf32>
      %c0_11 = arith.constant 0 : index
      %c0_12 = arith.constant 0 : index
      %13 = vector.load %arg5[%c0_11, %c0_12] : memref<1x128xf32, #tpu.memory_space<vmem>>, vector<1x128xf32>
      %14 = vector.broadcast %13 : vector<1x128xf32> to vector<8x128xf32>
      %15 = arith.addf %12, %14 : vector<8x128xf32>
      %c0_13 = arith.constant 0 : index
      %c0_14 = arith.constant 0 : index
      %16 = vector.load %arg7[%c0_13, %c0_14] : memref<8x128xf32, #tpu.memory_space<vmem>>, vector<8x128xf32>
      tpu.vector_store %arg7[%c0_13, %c0_14], %15 {strides = array<i32>} : memref<8x128xf32, #tpu.memory_space<vmem>>, vector<8x128xf32>,
    } else {
    }
    %c0 = arith.constant 0 : index
    %c0_1 = arith.constant 0 : index
    %3 = vector.load %arg7[%c0, %c0_1] : memref<8x128xf32, #tpu.memory_space<vmem>>, vector<8x128xf32>
    %c0_2 = arith.constant 0 : index
    %c0_3 = arith.constant 0 : index
    %4 = vector.load %arg3[%c0_2, %c0_3] : memref<8x128xf32, #tpu.memory_space<vmem>>, vector<8x128xf32>
    %c0_4 = arith.constant 0 : index
    %c0_5 = arith.constant 0 : index
    %5 = vector.load %arg4[%c0_4, %c0_5] : memref<128x128xf32, #tpu.memory_space<vmem>>, vector<128x128xf32>
    %cst = arith.constant dense<0.000000e+00> : vector<8x128xf32>
    %6 = tpu.matmul %4, %5, %cst {dimension_numbers = #tpu.dot_dimension_numbers<[1], [0], [0], [1], [0, 0, 1, 1], [], []>} : vector<8x128xf32>, vector<128x128xf32>, vector<8x128xf32> -> vector<8x128xf32>
    %7 = arith.addf %3, %6 : vector<8x128xf32>
    %c0_6 = arith.constant 0 : index
    %c0_7 = arith.constant 0 : index
    %8 = vector.load %arg7[%c0_6, %c0_7] : memref<8x128xf32, #tpu.memory_space<vmem>>, vector<8x128xf32>
    tpu.vector_store %arg7[%c0_6, %c0_7], %7 {strides = array<i32>} : memref<8x128xf32, #tpu.memory_space<vmem>>, vector<8x128xf32>,
    %c0_i32_8 = arith.constant 0 : i32
    %9 = arith.cmpi eq, %arg2, %c0_i32_8 : i32
    %10 = arith.extui %9 : i1 to i32
    %c0_i32_9 = arith.constant 0 : i32
    %11 = arith.cmpi ne, %10, %c0_i32_9 : i32
    scf.if %11 {
      %c0_10 = arith.constant 0 : index
      %c0_11 = arith.constant 0 : index
      %12 = vector.load %arg7[%c0_10, %c0_11] : memref<8x128xf32, #tpu.memory_space<vmem>>, vector<8x128xf32>
      %c0_12 = arith.constant 0 : index
      %c0_13 = arith.constant 0 : index
      %13 = vector.load %arg6[%c0_12, %c0_13] : memref<8x128xf32, #tpu.memory_space<vmem>>, vector<8x128xf32>
      tpu.vector_store %arg6[%c0_12, %c0_13], %12 {strides = array<i32>} : memref<8x128xf32, #tpu.memory_space<vmem>>, vector<8x128xf32>,
    } else {
    }
    return
  }
  func.func @transform_0(%arg0: i32, %arg1: i32, %arg2: i32) -> (i32, i32) {
    %c0_i32 = arith.constant 0 : i32
    return %arg0, %arg2 : i32, i32
  }
  func.func @transform_1(%arg0: i32, %arg1: i32, %arg2: i32) -> (i32, i32) {
    %c0_i32 = arith.constant 0 : i32
    return %arg2, %arg1 : i32, i32
  }
  func.func @transform_2(%arg0: i32, %arg1: i32, %arg2: i32) -> (i32, i32) {
    %c0_i32 = arith.constant 0 : i32
    %c0_i32_0 = arith.constant 0 : i32
    return %c0_i32, %arg1 : i32, i32
  }
  func.func @transform_3(%arg0: i32, %arg1: i32, %arg2: i32) -> (i32, i32) {
    %c0_i32 = arith.constant 0 : i32
    return %arg0, %arg1 : i32, i32
  }
}

</mosaic_0001>

<llo_original>
// kernel: tpu_custom_call.1
$region0: #{tpu_custom_call.1}
  #allocation0 [shape = 'u32[]', space=smem, size = 0x4, offset = 0x4, fixed_abs, tag = 'smem constant byte address 0x4 - core index']
  #allocation1 [shape = 'u32[144,128]{1,0:T(1,128)}', space=vmem, size = 0x12000, scoped, tag = 'internal scratch']
  #allocation2 [shape = 'f32[8,128]{1,0:T(8,128)}', space=vmem, size = 0x1000, scoped, tag = 'scratch operand']
  %s0 = inlined_call_operand.hbm [shape: f32[8,128], index: 0, kind: input, shape index: {}]
  %s1 = inlined_call_operand.hbm [shape: f32[128,128], index: 1, kind: input, shape index: {}]
  %s2 = inlined_call_operand.vmem [shape: f32[1,128], index: 2, kind: input, shape index: {}]
  %s3 = inlined_call_operand.hbm [shape: f32[8,128], index: 3, kind: output, shape index: {}]
  %s4 = sld [smem:[#allocation0]]
  $region38: #{tpu_custom_call.1} parent=0
    _
  %s6 = ssub.s32 1, %s4
  %s7 = scalar_select 0, %s6, %s4
  $region1: #{tpu_custom_call.1} parent=0
    #allocation3 [shape = 'u8[4096]{0}', space=vmem, size = 0x1000, scoped, tag = 'input window, operand 0, single buffered']
    #allocation4 [shape = 's32[1]{0}', space=sflag, size = 0x4, scoped, tag = 'scoped memory for tpu_custom_call.1']
    #allocation5 [shape = 's32[1]{0}', space=sflag, size = 0x4, scoped, tag = 'scoped memory for tpu_custom_call.1']
    #allocation6 [shape = 'u8[65536]{0}', space=vmem, size = 0x10000, scoped, tag = 'input window, operand 1, single buffered']
    #allocation7 [shape = 's32[1]{0}', space=sflag, size = 0x4, scoped, tag = 'scoped memory for tpu_custom_call.1']
    #allocation8 [shape = 'u8[4096]{0}', space=vmem, size = 0x1000, scoped, tag = 'output window, operand 0, single buffered']
    %8 = vsyncpa [#allocation4], 0
    %9 = vsyncpa [#allocation7], 0
    %10 = vsyncpa [#allocation5], 0
    // Predicated region
    $region2: #{tpu_custom_call.1} parent=1 // pred_check
      _
    $region3: #{tpu_custom_call.1} parent=1 // pred_check_branch
      %12 = sbr.rel (0) target = $region5
    $region4: #{tpu_custom_call.1} parent=1 // pred_region
      %s14 = ssub.s32 128, 128
      %15 = vsyncadd [#allocation4], %s14
      %s17 = sshll.u32 [#allocation3], 4
      %s18 = int_to_ptr.vmem [resolvable:$true] %s17
      %20 = dma.hbm_to_vmem [thread:$0]  %s0, 128, %s18, [#allocation4]
    $region5: #{tpu_custom_call.1} parent=1 // pred_fallthru
      _
    // Predicated region
    $region6: #{tpu_custom_call.1} parent=1 // pred_check
      _
    $region7: #{tpu_custom_call.1} parent=1 // pred_check_branch
      %22 = sbr.rel (0) target = $region9
    $region8: #{tpu_custom_call.1} parent=1 // pred_region
      %s24 = ssub.s32 2048, 2048
      %25 = vsyncadd [#allocation7], %s24
      %s26 = sshll.u32 [#allocation6], 4
      %s27 = int_to_ptr.vmem [resolvable:$true] %s26
      %32 = dma.hbm_to_vmem [thread:$0]  %s1, 2048, %s27, [#allocation7], 128, 128, 8
    $region9: #{tpu_custom_call.1} parent=1 // pred_fallthru
      _
    // Predicated region
    $region10: #{tpu_custom_call.1} parent=1 // pred_check
      _
    $region11: #{tpu_custom_call.1} parent=1 // pred_check_branch
      %34 = sbr.rel (0) target = $region13
    $region12: #{tpu_custom_call.1} parent=1 // pred_region
      _
    $region13: #{tpu_custom_call.1} parent=1 // pred_fallthru
      _
    // Predicated region
    $region14: #{tpu_custom_call.1} parent=1 // pred_check
      _
    $region15: #{tpu_custom_call.1} parent=1 // pred_check_branch
      %36 = sbr.rel (0) target = $region17
    $region16: #{tpu_custom_call.1} parent=1 // pred_region
      %37 = dma.done [#allocation4], 128
    $region17: #{tpu_custom_call.1} parent=1 // pred_fallthru
      _
    // Predicated region
    $region18: #{tpu_custom_call.1} parent=1 // pred_check
      _
    $region19: #{tpu_custom_call.1} parent=1 // pred_check_branch
      %39 = sbr.rel (0) target = $region21
    $region20: #{tpu_custom_call.1} parent=1 // pred_region
      %40 = dma.done [#allocation7], 2048
    $region21: #{tpu_custom_call.1} parent=1 // pred_fallthru
      _
    %p41 = scmp.eq.s32.totalorder 0, 0
    // Predicated region
    $region22: #{tpu_custom_call.1} parent=1 // pred_check
      %p42 = pneg %p41
    $region23: #{tpu_custom_call.1} parent=1 // pred_check_branch
      %44 = sbr.rel (%p42) target = $region25
    $region24: #{tpu_custom_call.1} parent=1 // pred_region
      %v45 = vld [vmem:[%s2] sm:$0x1]
      %v47 = vlaneseq
      %v48 = vshrl.u32 %v47, 7
      %v49 = vsub.s32 0, %v48
      %v50 = vrot.slane %v45, %v49
      %v52 = vadd.f32 %v50, 0.0
      %53 = vst [vmem:[#allocation2] sm:$0xff] %v52
    $region25: #{tpu_custom_call.1} parent=1 // pred_fallthru
      _
    %v54 = vld [vmem:[#allocation2] sm:$0xff]
    %v55 = vld [vmem:[#allocation3] sm:$0xff]
    %v56 = vld [vmem:[#allocation6] sm:$0xff]
    %v57 = vld [vmem:[#allocation6 + $0x8] sm:$0xff]
    %v58 = vld [vmem:[#allocation6 + $0x10] sm:$0xff]
    %v59 = vld [vmem:[#allocation6 + $0x18] sm:$0xff]
    %v60 = vld [vmem:[#allocation6 + $0x20] sm:$0xff]
    %v61 = vld [vmem:[#allocation6 + $0x28] sm:$0xff]
    %v62 = vld [vmem:[#allocation6 + $0x30] sm:$0xff]
    %v63 = vld [vmem:[#allocation6 + $0x38] sm:$0xff]
    %v64 = vld [vmem:[#allocation6 + $0x40] sm:$0xff]
    %v65 = vld [vmem:[#allocation6 + $0x48] sm:$0xff]
    %v66 = vld [vmem:[#allocation6 + $0x50] sm:$0xff]
    %v67 = vld [vmem:[#allocation6 + $0x58] sm:$0xff]
    %v68 = vld [vmem:[#allocation6 + $0x60] sm:$0xff]
    %v69 = vld [vmem:[#allocation6 + $0x68] sm:$0xff]
    %v70 = vld [vmem:[#allocation6 + $0x70] sm:$0xff]
    %v71 = vld [vmem:[#allocation6 + $0x78] sm:$0xff]
    %72 = vmatprep.subr.mxu0 0.0
    %73 = vmatpush1.msra.mxu0 %v71
    %74 = vmatprep.subr.mxu0 0.0
    %75 = vmatpush1.msra.mxu0 %v70
    %76 = vmatprep.subr.mxu0 0.0
    %77 = vmatpush1.msra.mxu0 %v69
    %78 = vmatprep.subr.mxu0 0.0
    %79 = vmatpush1.msra.mxu0 %v68
    %80 = vmatprep.subr.mxu0 0.0
    %81 = vmatpush1.msra.mxu0 %v67
    %82 = vmatprep.subr.mxu0 0.0
    %83 = vmatpush1.msra.mxu0 %v66
    %84 = vmatprep.subr.mxu0 0.0
    %85 = vmatpush1.msra.mxu0 %v65
    %86 = vmatprep.subr.mxu0 0.0
    %87 = vmatpush1.msra.mxu0 %v64
    %88 = vmatprep.subr.mxu0 0.0
    %89 = vmatpush1.msra.mxu0 %v63
    %90 = vmatprep.subr.mxu0 0.0
    %91 = vmatpush1.msra.mxu0 %v62
    %92 = vmatprep.subr.mxu0 0.0
    %93 = vmatpush1.msra.mxu0 %v61
    %94 = vmatprep.subr.mxu0 0.0
    %95 = vmatpush1.msra.mxu0 %v60
    %96 = vmatprep.subr.mxu0 0.0
    %97 = vmatpush1.msra.mxu0 %v59
    %98 = vmatprep.subr.mxu0 0.0
    %99 = vmatpush1.msra.mxu0 %v58
    %100 = vmatprep.subr.mxu0 0.0
    %101 = vmatpush1.msra.mxu0 %v57
    %102 = vmatprep.subr.mxu0 0.0
    %103 = vmatpush1.msra.mxu0 %v56
    %104 = vmatprep.subr.mxu0 0.0
    %105 = vmatpush2.msra.mxu0 0.0
    %106 = vmatprep.subr.mxu0 0.0
    %107 = vmatpush2.msra.mxu0 0.0
    %108 = vmatprep.subr.mxu0 0.0
    %109 = vmatpush2.msra.mxu0 0.0
    %110 = vmatprep.subr.mxu0 0.0
    %111 = vmatpush2.msra.mxu0 0.0
    %112 = vmatprep.subr.mxu0 0.0
    %113 = vmatpush2.msra.mxu0 0.0
    %114 = vmatprep.subr.mxu0 0.0
    %115 = vmatpush2.msra.mxu0 0.0
    %116 = vmatprep.subr.mxu0 0.0
    %117 = vmatpush2.msra.mxu0 0.0
    %118 = vmatprep.subr.mxu0 0.0
    %119 = vmatpush2.msra.mxu0 0.0
    %120 = vmatprep.subr.mxu0 0.0
    %121 = vmatpush2.msra.mxu0 0.0
    %122 = vmatprep.subr.mxu0 0.0
    %123 = vmatpush2.msra.mxu0 0.0
    %124 = vmatprep.subr.mxu0 0.0
    %125 = vmatpush2.msra.mxu0 0.0
    %126 = vmatprep.subr.mxu0 0.0
    %127 = vmatpush2.msra.mxu0 0.0
    %128 = vmatprep.subr.mxu0 0.0
    %129 = vmatpush2.msra.mxu0 0.0
    %130 = vmatprep.subr.mxu0 0.0
    %131 = vmatpush2.msra.mxu0 0.0
    %132 = vmatprep.subr.mxu0 0.0
    %133 = vmatpush2.msra.mxu0 0.0
    %134 = vmatprep.subr.mxu0 0.0
    %135 = vmatpush2.msra.mxu0 0.0
    %136 = vmatprep.mubr.f32.mxu0 0.0
    %137 = vmatmul.mubr.f32.gmra.mxu0 %v55
    %v138 = vpop.f32.mrf.mxu0
    %v139 = vadd.f32 0.0, %v138
    %v140 = vpop.f32.mrf.mxu0
    %141 = vdwg.mxu0
    %v142 = vadd.f32 %v54, %v139
    %143 = vst [vmem:[#allocation2] sm:$0xff] %v142
    // Predicated region
    $region26: #{tpu_custom_call.1} parent=1 // pred_check
      %p144 = pneg %p41
    $region27: #{tpu_custom_call.1} parent=1 // pred_check_branch
      %146 = sbr.rel (%p144) target = $region29
    $region28: #{tpu_custom_call.1} parent=1 // pred_region
      %v147 = vld [vmem:[#allocation2] sm:$0xff]
      %148 = vst [vmem:[#allocation8] sm:$0xff] %v147
    $region29: #{tpu_custom_call.1} parent=1 // pred_fallthru
      _
    // Predicated region
    $region30: #{tpu_custom_call.1} parent=1 // pred_check
      _
    $region31: #{tpu_custom_call.1} parent=1 // pred_check_branch
      %150 = sbr.rel (0) target = $region33
    $region32: #{tpu_custom_call.1} parent=1 // pred_region
      %s152 = ssub.s32 128, 128
      %153 = vsyncadd [#allocation5], %s152
      %s155 = sshll.u32 [#allocation8], 4
      %s156 = int_to_ptr.vmem [resolvable:$true] %s155
      %158 = dma.vmem_to_hbm [thread:$0]  %s156, 128, %s3, [#allocation5]
    $region33: #{tpu_custom_call.1} parent=1 // pred_fallthru
      _
    // Predicated region
    $region34: #{tpu_custom_call.1} parent=1 // pred_check
      _
    $region35: #{tpu_custom_call.1} parent=1 // pred_check_branch
      %160 = sbr.rel (0) target = $region37
    $region36: #{tpu_custom_call.1} parent=1 // pred_region
      %161 = dma.done [#allocation5], 128
    $region37: #{tpu_custom_call.1} parent=1 // pred_fallthru
      _
    %162 = vsyncpa [#allocation4], 1
    %163 = vsyncpa [#allocation7], 1
    %164 = vsyncpa [#allocation5], 1

</llo_original>
